<compile_context>
chip_gen: v7x
topology: tpu7x:2x2x1
jax: 0.10.0
libtpu: 0.0.40
codegen_flags: <defaults>
</compile_context>

<pallas_src>
import math
from functools import partial

import jax
import jax.numpy as jnp
from jax.experimental import pallas as pl
from jax.experimental.pallas import tpu as pltpu


def _swiglu_ffn_kernel(x_ref, w13_ref, w2_ref, o_ref, *, block_h):
    """One (block_m, D) row tile x one hidden tile of the SwiGLU FFN.

    grid = (M // block_m, H // block_h)
      axis 0 ("parallel")  : independent row tiles
      axis 1 ("arbitrary") : reduction over hidden tiles; o_ref (f32) is the
                             accumulator (same output block across k).
    """
    k = pl.program_id(1)

    @pl.when(k == 0)
    def _init():
        o_ref[...] = jnp.zeros_like(o_ref)

    x = x_ref[...]                       # (bm, D)    bf16
    w13 = w13_ref[0]                     # (D, 2*bh)  bf16: [w1 tile | w3 tile]
    # single fused matmul covering this hidden tile of BOTH w1 and w3
    h13 = jnp.dot(x, w13, preferred_element_type=jnp.float32)   # (bm, 2*bh) f32
    g = h13[:, :block_h]                 # lane-aligned free views (bh % 128 == 0)
    u = h13[:, block_h:]
    act = (g * jax.nn.sigmoid(g)) * u    # SiLU gate in f32 (VPU + EUP)
    # second matmul for this hidden tile; f32 accumulation across tiles
    o_ref[...] += jnp.dot(act.astype(w2_ref.dtype), w2_ref[...],
                          preferred_element_type=jnp.float32)


def feed_forward(x, w1, w2, w3, *, block_m=256, block_h=512,
                 param_dtype=jnp.bfloat16):
    """SwiGLU FeedForward.  Weights stored (in_features, out_features):
         w1: (D, H), w3: (D, H), w2: (H, D);   x: (..., D) f32 -> (..., D) f32.
    """
    orig_shape = x.shape
    D = x.shape[-1]
    H = w1.shape[-1]
    M = 1
    for s in orig_shape[:-1]:
        M *= s

    block_m = min(block_m, M)
    block_h = min(block_h, H)
    assert M % block_m == 0, (M, block_m)
    assert H % block_h == 0, (H, block_h)
    assert block_m % 8 == 0 and block_h % 128 == 0, (block_m, block_h)
    n_h = H // block_h
    n_m = M // block_m

    # ---- one-time weight packing (plain JAX; would be done offline) ----
    # fuse the k-th hidden tile of w1 and w3 side by side -> one wide matmul.
    w13 = jnp.concatenate(
        [w1.reshape(D, n_h, block_h).transpose(1, 0, 2),
         w3.reshape(D, n_h, block_h).transpose(1, 0, 2)],
        axis=-1).astype(param_dtype)                 # (n_h, D, 2*bh)
    w2p = w2.astype(param_dtype)                     # (H, D)

    x2 = x.reshape(M, D).astype(param_dtype)         # bf16 halves HBM->VMEM bytes

    grid = (n_m, n_h)

    cost = pl.CostEstimate(
        flops=6 * M * D * H,                         # 4MDH (fused w1/w3) + 2MHD (w2)
        transcendentals=M * H,                       # sigmoid
        bytes_accessed=(M * D * 2) * n_h             # x re-read per hidden tile
                       + (D * 2 * H * 2) * n_m       # w13 re-read per row tile
                       + (H * D * 2) * n_m           # w2 re-read per row tile
                       + (M * D * 4),                # f32 output
    )

    # streamed working set: double-buffered inputs + resident f32 out block
    step_bytes = (block_m * D * 2          # x block (bf16)
                  + D * 2 * block_h * 2    # fused w13 block (bf16)
                  + block_h * D * 2)       # w2 block (bf16)
    vmem_limit = int(max(16 * 1024 * 1024,
                         min(64 * 1024 * 1024,
                             4 * step_bytes
                             + 8 * block_m * block_h   # f32 h13 temporaries
                             + 4 * block_m * D         # f32 output block
                             + (2 << 20))))

    out = pl.pallas_call(
        partial(_swiglu_ffn_kernel, block_h=block_h),
        out_shape=jax.ShapeDtypeStruct((M, D), jnp.float32),
        grid_spec=pltpu.PrefetchScalarGridSpec(
            num_scalar_prefetch=0,
            grid=grid,
            in_specs=[
                pl.BlockSpec((block_m, D), lambda i, k: (i, 0)),
                pl.BlockSpec((1, D, 2 * block_h), lambda i, k: (k, 0, 0)),
                pl.BlockSpec((block_h, D), lambda i, k: (k, 0)),
            ],
            out_specs=pl.BlockSpec((block_m, D), lambda i, k: (i, 0)),
        ),
        compiler_params=pltpu.CompilerParams(
            dimension_semantics=("parallel", "arbitrary"),
            vmem_limit_bytes=vmem_limit),
        cost_estimate=cost,
    )(x2, w13, w2p)

    return out.reshape(orig_shape)


if __name__ == "__main__":
    # small, lane-friendly demo shapes: batch=2, seq=8, dim=128, hidden=4*dim
    B, S, D, H = 2, 8, 128, 512
    key = jax.random.PRNGKey(0)
    kx, k1, k2, k3 = jax.random.split(key, 4)
    x = jax.random.normal(kx, (B, S, D), jnp.float32)
    w1 = jax.random.normal(k1, (D, H), jnp.float32) / math.sqrt(D)
    w3 = jax.random.normal(k3, (D, H), jnp.float32) / math.sqrt(D)
    w2 = jax.random.normal(k2, (H, D), jnp.float32) / math.sqrt(H)

    # block_m=8 -> 2 parallel row tiles; block_h=256 -> 2 streamed hidden tiles
    out = feed_forward(x, w1, w2, w3, block_m=8, block_h=256)
    out = jax.block_until_ready(out)

    # reference with identical bf16 weight/activation casting, f32 accumulation
    xb = x.astype(jnp.bfloat16)
    g = jnp.dot(xb, w1.astype(jnp.bfloat16), preferred_element_type=jnp.float32)
    u = jnp.dot(xb, w3.astype(jnp.bfloat16), preferred_element_type=jnp.float32)
    act = (g * jax.nn.sigmoid(g)) * u
    ref = jnp.dot(act.astype(jnp.bfloat16), w2.astype(jnp.bfloat16),
                  preferred_element_type=jnp.float32)

    assert out.shape == (B, S, D), out.shape
    assert bool(jnp.all(jnp.isfinite(out)))
    assert bool(jnp.allclose(out, ref, rtol=2e-2, atol=2e-2)), float(
        jnp.max(jnp.abs(out - ref)))
    print("KERNEL_OK")
</pallas_src>

<mosaic_0001>
module attributes {stable_mosaic.version = 11 : i64} {
  func.func @_swiglu_ffn_kernel(%arg0: i32, %arg1: i32, %arg2: memref<8x128xbf16, #tpu.memory_space<vmem>>, %arg3: memref<1x128x512xbf16, #tpu.memory_space<vmem>>, %arg4: memref<256x128xbf16, #tpu.memory_space<vmem>>, %arg5: memref<8x128xf32, #tpu.memory_space<vmem>>) attributes {dimension_semantics = [#tpu.dimension_semantics<parallel>, #tpu.dimension_semantics<arbitrary>], iteration_bounds = array<i64: 2, 2>, scalar_prefetch = 0 : i64, scratch_operands = 0 : i64, tpu.core_type = #tpu.core_type<tc>, window_params = [{transform_indices = @transform_0, window_bounds = array<i64: 8, 128>}, {transform_indices = @transform_1, window_bounds = array<i64: 1, 128, 512>}, {transform_indices = @transform_2, window_bounds = array<i64: 256, 128>}, {transform_indices = @transform_3, window_bounds = array<i64: 8, 128>}]} {
    %c0_i32 = arith.constant 0 : i32
    %0 = arith.cmpi eq, %arg1, %c0_i32 : i32
    %1 = arith.extui %0 : i1 to i32
    %c0_i32_0 = arith.constant 0 : i32
    %2 = arith.cmpi ne, %1, %c0_i32_0 : i32
    scf.if %2 {
      %cst_13 = arith.constant 0.000000e+00 : f32
      %22 = vector.broadcast %cst_13 : f32 to vector<8x128xf32>
      %c0_14 = arith.constant 0 : index
      %c0_15 = arith.constant 0 : index
      %23 = vector.load %arg5[%c0_14, %c0_15] : memref<8x128xf32, #tpu.memory_space<vmem>>, vector<8x128xf32>
      tpu.vector_store %arg5[%c0_14, %c0_15], %22 {strides = array<i32>} : memref<8x128xf32, #tpu.memory_space<vmem>>, vector<8x128xf32>,
    } else {
    }
    %c0 = arith.constant 0 : index
    %c0_1 = arith.constant 0 : index
    %3 = vector.load %arg2[%c0, %c0_1] : memref<8x128xbf16, #tpu.memory_space<vmem>>, vector<8x128xbf16>
    %c0_2 = arith.constant 0 : index
    %c0_3 = arith.constant 0 : index
    %c0_4 = arith.constant 0 : index
    %4 = vector.load %arg3[%c0_2, %c0_3, %c0_4] : memref<1x128x512xbf16, #tpu.memory_space<vmem>>, vector<1x128x512xbf16>
    %5 = vector.shape_cast %4 : vector<1x128x512xbf16> to vector<128x512xbf16>
    %cst = arith.constant dense<0.000000e+00> : vector<8x512xf32>
    %6 = tpu.matmul %3, %5, %cst {dimension_numbers = #tpu.dot_dimension_numbers<[1], [0], [0], [1], [0, 0, 1, 1], [], []>} : vector<8x128xbf16>, vector<128x512xbf16>, vector<8x512xf32> -> vector<8x512xf32>
    %7 = vector.extract_strided_slice %6 {offsets = [0, 0], sizes = [8, 256], strides = [1, 1]} : vector<8x512xf32> to vector<8x256xf32>
    %8 = vector.extract_strided_slice %6 {offsets = [0, 256], sizes = [8, 256], strides = [1, 1]} : vector<8x512xf32> to vector<8x256xf32>
    %9 = arith.negf %7 : vector<8x256xf32>
    %10 = math.exp %9 : vector<8x256xf32>
    %cst_5 = arith.constant 1.000000e+00 : f32
    %11 = vector.broadcast %cst_5 : f32 to vector<8x256xf32>
    %12 = arith.addf %11, %10 : vector<8x256xf32>
    %13 = arith.divf %11, %12 : vector<8x256xf32>
    %14 = arith.mulf %7, %13 : vector<8x256xf32>
    %15 = arith.mulf %14, %8 : vector<8x256xf32>
    %c0_6 = arith.constant 0 : index
    %c0_7 = arith.constant 0 : index
    %16 = vector.load %arg5[%c0_6, %c0_7] : memref<8x128xf32, #tpu.memory_space<vmem>>, vector<8x128xf32>
    %17 = arith.truncf %15 : vector<8x256xf32> to vector<8x256xbf16>
    %c0_8 = arith.constant 0 : index
    %c0_9 = arith.constant 0 : index
    %18 = vector.load %arg4[%c0_8, %c0_9] : memref<256x128xbf16, #tpu.memory_space<vmem>>, vector<256x128xbf16>
    %cst_10 = arith.constant dense<0.000000e+00> : vector<8x128xf32>
    %19 = tpu.matmul %17, %18, %cst_10 {dimension_numbers = #tpu.dot_dimension_numbers<[1], [0], [0], [1], [0, 0, 1, 1], [], []>} : vector<8x256xbf16>, vector<256x128xbf16>, vector<8x128xf32> -> vector<8x128xf32>
    %20 = arith.addf %16, %19 : vector<8x128xf32>
    %c0_11 = arith.constant 0 : index
    %c0_12 = arith.constant 0 : index
    %21 = vector.load %arg5[%c0_11, %c0_12] : memref<8x128xf32, #tpu.memory_space<vmem>>, vector<8x128xf32>
    tpu.vector_store %arg5[%c0_11, %c0_12], %20 {strides = array<i32>} : memref<8x128xf32, #tpu.memory_space<vmem>>, vector<8x128xf32>,
    return
  }
  func.func @transform_0(%arg0: i32, %arg1: i32) -> (i32, i32) {
    %c0_i32 = arith.constant 0 : i32
    %c0_i32_0 = arith.constant 0 : i32
    return %arg0, %c0_i32 : i32, i32
  }
  func.func @transform_1(%arg0: i32, %arg1: i32) -> (i32, i32, i32) {
    %c0_i32 = arith.constant 0 : i32
    %c0_i32_0 = arith.constant 0 : i32
    %c0_i32_1 = arith.constant 0 : i32
    return %arg1, %c0_i32, %c0_i32_0 : i32, i32, i32
  }
  func.func @transform_2(%arg0: i32, %arg1: i32) -> (i32, i32) {
    %c0_i32 = arith.constant 0 : i32
    %c0_i32_0 = arith.constant 0 : i32
    return %arg1, %c0_i32 : i32, i32
  }
  func.func @transform_3(%arg0: i32, %arg1: i32) -> (i32, i32) {
    %c0_i32 = arith.constant 0 : i32
    %c0_i32_0 = arith.constant 0 : i32
    return %arg0, %c0_i32 : i32, i32
  }
}

</mosaic_0001>

<llo_original>
// kernel: tpu_custom_call.1
$region0: #{tpu_custom_call.1}
  #allocation0 [shape = 'u32[]', space=smem, size = 0x4, offset = 0x4, fixed_abs, tag = 'smem constant byte address 0x4 - core index']
  #allocation1 [shape = 'u32[144,128]{1,0:T(1,128)}', space=vmem, size = 0x12000, scoped, tag = 'internal scratch']
  %s0 = inlined_call_operand.hbm [shape: bf16[16,128], index: 0, kind: input, shape index: {}]
  %s1 = inlined_call_operand.hbm [shape: bf16[2,128,512], index: 1, kind: input, shape index: {}]
  %s2 = inlined_call_operand.hbm [shape: bf16[512,128], index: 2, kind: input, shape index: {}]
  %s3 = inlined_call_operand.hbm [shape: f32[16,128], index: 3, kind: output, shape index: {}]
  %s4 = sld [smem:[#allocation0]]
  $region61: #{tpu_custom_call.1} parent=0
    _
  %s6 = ssub.s32 1, %s4
  %s7 = scalar_select 0, %s6, %s4
  $region1: #{tpu_custom_call.1} parent=0
    #allocation2 [shape = 'u8[4096]{0}', space=vmem, size = 0x1000, scoped, tag = 'input window, operand 0']
    #allocation3 [shape = 's32[2]{0}', space=sflag, size = 0x8, scoped, tag = 'scoped memory for tpu_custom_call.1']
    #allocation4 [shape = 's32[2]{0}', space=sflag, size = 0x8, scoped, tag = 'scoped memory for tpu_custom_call.1']
    #allocation5 [shape = 'u8[262144]{0}', space=vmem, size = 0x40000, scoped, tag = 'input window, operand 1']
    #allocation6 [shape = 's32[2]{0}', space=sflag, size = 0x8, scoped, tag = 'scoped memory for tpu_custom_call.1']
    #allocation7 [shape = 'u8[131072]{0}', space=vmem, size = 0x20000, scoped, tag = 'input window, operand 2']
    #allocation8 [shape = 'u8[8192]{0}', space=vmem, size = 0x2000, scoped, tag = 'output window, operand 0']
    %8 = vsyncpa [#allocation3], 0
    %s9 = scalar_lea.sflag [#allocation3], 1
    %10 = vsyncpa %s9, 0
    %11 = vsyncpa [#allocation6], 0
    %s12 = scalar_lea.sflag [#allocation6], 1
    %13 = vsyncpa %s12, 0
    %14 = vsyncpa [#allocation4], 0
    %s15 = scalar_lea.sflag [#allocation4], 1
    %16 = vsyncpa %s15, 0
    loop: start=0, step=1, limit=6
    $region2: #{tpu_custom_call.1} parent=1 // loop_pre_header
      _
    $region3: #{tpu_custom_call.1} parent=1 // loop_header
      %s18 = sphi 0, %s22
      %p19 = scmp.ge.s32.totalorder %s18, 6
      %s25 = sphi 0, %s37
      %s26 = sphi 0, %s33
      %s27 = sphi 0, %s25
      %s28 = sphi 0, %s26
      %s29 = sphi 0, %s27
      %s30 = sphi 0, %s28
      %s40 = sphi 0, %s42
      %s43 = sphi 0, %s40
      %s44 = sphi 0, %s43
      %s60 = sphi 0, %s44
      %s66 = sphi 0, %s68
      %s69 = sphi 0, %s66
      %s70 = sphi 0, %s69
      %s86 = sphi 0, %s70
      %s92 = sphi 0, %s94
      %s95 = sphi 0, %s92
      %s96 = sphi 0, %s95
      %s112 = sphi 0, %s96
      %s118 = sphi 0, %s120
      %s121 = sphi 0, %s118
      %s122 = sphi 0, %s121
      %s138 = sphi 0, %s122
    $region4: #{tpu_custom_call.1} parent=1 // loop_header_branch
      %21 = sbr.rel (%p19) target = $region8
    $region5: #{tpu_custom_call.1} parent=1 // loop_body
      %s23 = ssub.s32 %s18, 1
      %s24 = ssub.s32 %s18, 2
      %s31 = sadd.s32 1, %s26
      %p32 = scmp.ge.s32.totalorder %s31, 2
      %s33 = scalar_select %p32, 0, %s31
      %s34 = sadd.s32 1, %s25
      %s35 = scalar_select %p32, %s34, %s25
      %p36 = scmp.ge.s32.totalorder %s35, 2
      %s37 = scalar_select %p36, 0, %s35
      %s38 = ssub.s32 %s25, %s37
      %p39 = scmp.eq.s32.totalorder %s38, 0
      %s41 = sadd.s32 %s40, 1
      %s42 = scalar_select %p39, %s40, %s41
      %p45 = pneg %p39
      %p46 = scmp.eq.s32.totalorder %s18, 3
      %p47 = por %p45, %p46
      %p48 = scmp.ne.s32.totalorder %s40, %s43
      %p49 = scmp.eq.s32.totalorder %s18, 0
      %p50 = por %p48, %p49
      %p51 = scmp.ne.s32.totalorder %s40, %s43
      %p52 = scmp.eq.s32.totalorder %s23, 3
      %p53 = por %p51, %p52
      %p54 = scmp.ne.s32.totalorder %s43, %s44
      %p55 = scmp.eq.s32.totalorder %s23, 0
      %p56 = por %p54, %p55
      %p57 = scmp.ne.s32.totalorder %s43, %s44
      %p58 = scmp.eq.s32.totalorder %s24, 3
      %p59 = por %p57, %p58
      %p61 = scmp.ne.s32.totalorder %s44, %s60
      %p62 = scmp.eq.s32.totalorder %s24, 0
      %p63 = por %p61, %p62
      %s64 = ssub.s32 %s26, %s33
      %p65 = scmp.eq.s32.totalorder %s64, 0
      %s67 = sadd.s32 %s66, 1
      %s68 = scalar_select %p65, %s66, %s67
      %p71 = pneg %p65
      %p72 = scmp.eq.s32.totalorder %s18, 3
      %p73 = por %p71, %p72
      %p74 = scmp.ne.s32.totalorder %s66, %s69
      %p75 = scmp.eq.s32.totalorder %s18, 0
      %p76 = por %p74, %p75
      %p77 = scmp.ne.s32.totalorder %s66, %s69
      %p78 = scmp.eq.s32.totalorder %s23, 3
      %p79 = por %p77, %p78
      %p80 = scmp.ne.s32.totalorder %s69, %s70
      %p81 = scmp.eq.s32.totalorder %s23, 0
      %p82 = por %p80, %p81
      %p83 = scmp.ne.s32.totalorder %s69, %s70
      %p84 = scmp.eq.s32.totalorder %s24, 3
      %p85 = por %p83, %p84
      %p87 = scmp.ne.s32.totalorder %s70, %s86
      %p88 = scmp.eq.s32.totalorder %s24, 0
      %p89 = por %p87, %p88
      %s90 = ssub.s32 %s26, %s33
      %p91 = scmp.eq.s32.totalorder %s90, 0
      %s93 = sadd.s32 %s92, 1
      %s94 = scalar_select %p91, %s92, %s93
      %p97 = pneg %p91
      %p98 = scmp.eq.s32.totalorder %s18, 3
      %p99 = por %p97, %p98
      %p100 = scmp.ne.s32.totalorder %s92, %s95
      %p101 = scmp.eq.s32.totalorder %s18, 0
      %p102 = por %p100, %p101
      %p103 = scmp.ne.s32.totalorder %s92, %s95
      %p104 = scmp.eq.s32.totalorder %s23, 3
      %p105 = por %p103, %p104
      %p106 = scmp.ne.s32.totalorder %s95, %s96
      %p107 = scmp.eq.s32.totalorder %s23, 0
      %p108 = por %p106, %p107
      %p109 = scmp.ne.s32.totalorder %s95, %s96
      %p110 = scmp.eq.s32.totalorder %s24, 3
      %p111 = por %p109, %p110
      %p113 = scmp.ne.s32.totalorder %s96, %s112
      %p114 = scmp.eq.s32.totalorder %s24, 0
      %p115 = por %p113, %p114
      %s116 = ssub.s32 %s25, %s37
      %p117 = scmp.eq.s32.totalorder %s116, 0
      %s119 = sadd.s32 %s118, 1
      %s120 = scalar_select %p117, %s118, %s119
      %p123 = pneg %p117
      %p124 = scmp.eq.s32.totalorder %s18, 3
      %p125 = por %p123, %p124
      %p126 = scmp.ne.s32.totalorder %s118, %s121
      %p127 = scmp.eq.s32.totalorder %s18, 0
      %p128 = por %p126, %p127
      %p129 = scmp.ne.s32.totalorder %s118, %s121
      %p130 = scmp.eq.s32.totalorder %s23, 3
      %p131 = por %p129, %p130
      %p132 = scmp.ne.s32.totalorder %s121, %s122
      %p133 = scmp.eq.s32.totalorder %s23, 0
      %p134 = por %p132, %p133
      %p135 = scmp.ne.s32.totalorder %s121, %s122
      %p136 = scmp.eq.s32.totalorder %s24, 3
      %p137 = por %p135, %p136
      %p139 = scmp.ne.s32.totalorder %s122, %s138
      %p140 = scmp.eq.s32.totalorder %s24, 0
      %p141 = por %p139, %p140
      %p142 = scmp.le.s32.totalorder 1, %s18
      %p143 = scmp.lt.s32.totalorder %s18, 5
      %p144 = pnand %p142, %p143
      %p145 = pneg %p144
      // Predicated region
      $region9: #{tpu_custom_call.1} parent=5 // pred_check
        _
      $region10: #{tpu_custom_call.1} parent=5 // pred_check_branch
        %147 = sbr.rel (%p144) target = $region12
      $region11: #{tpu_custom_call.1} parent=5 // pred_region
        %s148 = ssub.s32 %s18, 1
      $region12: #{tpu_custom_call.1} parent=5 // pred_fallthru
        _
      %p149 = scmp.lt.s32.totalorder %s18, 4
      // Predicated region
      $region13: #{tpu_custom_call.1} parent=5 // pred_check
        %p150 = pneg %p149
      $region14: #{tpu_custom_call.1} parent=5 // pred_check_branch
        %152 = sbr.rel (%p150) target = $region16
      $region15: #{tpu_custom_call.1} parent=5 // pred_region
        // Predicated region
        $region17: #{tpu_custom_call.1} parent=15 // pred_check
          %p153 = pneg %p50
        $region18: #{tpu_custom_call.1} parent=15 // pred_check_branch
          %155 = sbr.rel (%p153) target = $region20
        $region19: #{tpu_custom_call.1} parent=15 // pred_region
          %s156 = sand.u32 %s40, 1
          %s157 = scalar_lea.sflag [#allocation3], %s156
          %s158 = sand.u32 %s40, 1
          %s159 = smul.addr %s158, 4
          %s160 = scalar_lea.vmem [#allocation2], %s159
          %s162 = ssub.s32 64, 64
          %163 = vsyncadd %s157, %s162
          %s164 = smul.addr %s25, 64
          %s165 = scalar_lea.hbm %s0, %s164
          %s167 = sshll.u32 %s160, 4
          %s168 = int_to_ptr.vmem [resolvable:$true] %s167
          %170 = dma.hbm_to_vmem [thread:$0]  %s165, 64, %s168, %s157
        $region20: #{tpu_custom_call.1} parent=15 // pred_fallthru
          _
        // Predicated region
        $region21: #{tpu_custom_call.1} parent=15 // pred_check
          %p171 = pneg %p76
        $region22: #{tpu_custom_call.1} parent=15 // pred_check_branch
          %173 = sbr.rel (%p171) target = $region24
        $region23: #{tpu_custom_call.1} parent=15 // pred_region
          %s174 = sand.u32 %s18, 1
          %s175 = scalar_lea.sflag [#allocation6], %s174
          %s176 = sand.u32 %s66, 1
          %s177 = smul.addr %s176, 256
          %s178 = scalar_lea.vmem [#allocation5], %s177
          %s180 = ssub.s32 4096, 4096
          %181 = vsyncadd %s175, %s180
          %s182 = smul.addr %s26, 64
          %s183 = smul.addr %s182, 64
          %s184 = scalar_lea.hbm %s1, %s183
          %s185 = sshll.u32 %s178, 4
          %s186 = int_to_ptr.vmem [resolvable:$true] %s185
          %191 = dma.hbm_to_vmem [thread:$0]  %s184, 4096, %s186, %s175, 256, 256, 16
        $region24: #{tpu_custom_call.1} parent=15 // pred_fallthru
          _
        // Predicated region
        $region25: #{tpu_custom_call.1} parent=15 // pred_check
          %p192 = pneg %p102
        $region26: #{tpu_custom_call.1} parent=15 // pred_check_branch
          %194 = sbr.rel (%p192) target = $region28
        $region27: #{tpu_custom_call.1} parent=15 // pred_region
          %s195 = sand.u32 %s18, 1
          %s196 = scalar_lea.sflag [#allocation6], %s195
          %s197 = sand.u32 %s92, 1
          %s198 = smul.addr %s197, 128
          %s199 = scalar_lea.vmem [#allocation7], %s198
          %s200 = smul.u32 32, %s26
          %s202 = ssub.s32 2048, 2048
          %203 = vsyncadd %s196, %s202
          %s204 = smul.addr %s200, 64
          %s205 = scalar_lea.hbm %s2, %s204
          %s206 = sshll.u32 %s199, 4
          %s207 = int_to_ptr.vmem [resolvable:$true] %s206
          %212 = dma.hbm_to_vmem [thread:$0]  %s205, 2048, %s207, %s196, 64, 64, 4
        $region28: #{tpu_custom_call.1} parent=15 // pred_fallthru
          _
      $region16: #{tpu_custom_call.1} parent=5 // pred_fallthru
        _
      %p213 = scmp.le.s32.totalorder 1, %s18
      %p214 = scmp.lt.s32.totalorder %s18, 5
      %p215 = pnand %p213, %p214
      %p216 = pneg %p215
      // Predicated region
      $region29: #{tpu_custom_call.1} parent=5 // pred_check
        _
      $region30: #{tpu_custom_call.1} parent=5 // pred_check_branch
        %218 = sbr.rel (%p215) target = $region32
      $region31: #{tpu_custom_call.1} parent=5 // pred_region
        %s219 = ssub.s32 %s18, 1
        %s220 = sand.u32 %s43, 1
        %s221 = scalar_lea.sflag [#allocation3], %s220
        %s222 = sand.u32 %s43, 1
        %s223 = smul.addr %s222, 4
        %s224 = scalar_lea.vmem [#allocation2], %s223
        // Predicated region
        $region33: #{tpu_custom_call.1} parent=31 // pred_check
          %p225 = pneg %p56
        $region34: #{tpu_custom_call.1} parent=31 // pred_check_branch
          %227 = sbr.rel (%p225) target = $region36
        $region35: #{tpu_custom_call.1} parent=31 // pred_region
          %228 = dma.done %s221, 64
        $region36: #{tpu_custom_call.1} parent=31 // pred_fallthru
          _
        %s229 = sand.u32 %s23, 1
        %s230 = scalar_lea.sflag [#allocation6], %s229
        %s231 = sand.u32 %s69, 1
        %s232 = smul.addr %s231, 256
        %s233 = scalar_lea.vmem [#allocation5], %s232
        // Predicated region
        $region37: #{tpu_custom_call.1} parent=31 // pred_check
          %p234 = pneg %p82
        $region38: #{tpu_custom_call.1} parent=31 // pred_check_branch
          %236 = sbr.rel (%p234) target = $region40
        $region39: #{tpu_custom_call.1} parent=31 // pred_region
          %237 = dma.done %s230, 4096
        $region40: #{tpu_custom_call.1} parent=31 // pred_fallthru
          _
        %s238 = sand.u32 %s23, 1
        %s239 = scalar_lea.sflag [#allocation6], %s238
        %s240 = sand.u32 %s95, 1
        %s241 = smul.addr %s240, 128
        %s242 = scalar_lea.vmem [#allocation7], %s241
        // Predicated region
        $region41: #{tpu_custom_call.1} parent=31 // pred_check
          %p243 = pneg %p108
        $region42: #{tpu_custom_call.1} parent=31 // pred_check_branch
          %245 = sbr.rel (%p243) target = $region44
        $region43: #{tpu_custom_call.1} parent=31 // pred_region
          %246 = dma.done %s239, 2048
        $region44: #{tpu_custom_call.1} parent=31 // pred_fallthru
          _
        %s247 = sand.u32 %s43, 1
        %s248 = scalar_lea.sflag [#allocation3], %s247
        %s249 = sand.u32 %s43, 1
        %s250 = smul.addr %s249, 4
        %s251 = scalar_lea.vmem [#allocation2], %s250
        %p252 = pneg %p56
        %p253 = pneg %p53
        %s254 = sand.u32 %s23, 1
        %s255 = scalar_lea.sflag [#allocation6], %s254
        %s256 = sand.u32 %s69, 1
        %s257 = smul.addr %s256, 256
        %s258 = scalar_lea.vmem [#allocation5], %s257
        %p259 = pneg %p82
        %p260 = pneg %p79
        %s261 = sand.u32 %s23, 1
        %s262 = scalar_lea.sflag [#allocation6], %s261
        %s263 = sand.u32 %s95, 1
        %s264 = smul.addr %s263, 128
        %s265 = scalar_lea.vmem [#allocation7], %s264
        %p266 = pneg %p108
        %p267 = pneg %p105
        %p268 = pneg %p134
        %p269 = pneg %p131
        %s270 = sand.u32 %s121, 1
        %s271 = scalar_lea.sflag [#allocation4], %s270
        %s272 = sand.u32 %s121, 1
        %s273 = smul.addr %s272, 8
        %s274 = scalar_lea.vmem [#allocation8], %s273
        %s275 = smul.u32 32, %s28
        %p277 = scmp.eq.s32.totalorder %s28, 0
        // Predicated region
        $region45: #{tpu_custom_call.1} parent=31 // pred_check
          %p278 = pneg %p277
        $region46: #{tpu_custom_call.1} parent=31 // pred_check_branch
          %280 = sbr.rel (%p278) target = $region48
        $region47: #{tpu_custom_call.1} parent=31 // pred_region
          %281 = vst [vmem:[%s274] sm:$0xff] 0.0
        $region48: #{tpu_custom_call.1} parent=31 // pred_fallthru
          _
        %v282 = vld [vmem:[%s224] sm:$0xf]
        %v283 = vld [vmem:[%s233] sm:$0xff]
        %v284 = vld [vmem:[%s233 + $0x8] sm:$0xff]
        %v285 = vld [vmem:[%s233 + $0x10] sm:$0xff]
        %v286 = vld [vmem:[%s233 + $0x18] sm:$0xff]
        %v287 = vld [vmem:[%s233 + $0x20] sm:$0xff]
        %v288 = vld [vmem:[%s233 + $0x28] sm:$0xff]
        %v289 = vld [vmem:[%s233 + $0x30] sm:$0xff]
        %v290 = vld [vmem:[%s233 + $0x38] sm:$0xff]
        %v291 = vld [vmem:[%s233 + $0x40] sm:$0xff]
        %v292 = vld [vmem:[%s233 + $0x48] sm:$0xff]
        %v293 = vld [vmem:[%s233 + $0x50] sm:$0xff]
        %v294 = vld [vmem:[%s233 + $0x58] sm:$0xff]
        %v295 = vld [vmem:[%s233 + $0x60] sm:$0xff]
        %v296 = vld [vmem:[%s233 + $0x68] sm:$0xff]
        %v297 = vld [vmem:[%s233 + $0x70] sm:$0xff]
        %v298 = vld [vmem:[%s233 + $0x78] sm:$0xff]
        %v299 = vld [vmem:[%s233 + $0x80] sm:$0xff]
        %v300 = vld [vmem:[%s233 + $0x88] sm:$0xff]
        %v301 = vld [vmem:[%s233 + $0x90] sm:$0xff]
        %v302 = vld [vmem:[%s233 + $0x98] sm:$0xff]
        %v303 = vld [vmem:[%s233 + $0xa0] sm:$0xff]
        %v304 = vld [vmem:[%s233 + $0xa8] sm:$0xff]
        %v305 = vld [vmem:[%s233 + $0xb0] sm:$0xff]
        %v306 = vld [vmem:[%s233 + $0xb8] sm:$0xff]
        %v307 = vld [vmem:[%s233 + $0xc0] sm:$0xff]
        %v308 = vld [vmem:[%s233 + $0xc8] sm:$0xff]
        %v309 = vld [vmem:[%s233 + $0xd0] sm:$0xff]
        %v310 = vld [vmem:[%s233 + $0xd8] sm:$0xff]
        %v311 = vld [vmem:[%s233 + $0xe0] sm:$0xff]
        %v312 = vld [vmem:[%s233 + $0xe8] sm:$0xff]
        %v313 = vld [vmem:[%s233 + $0xf0] sm:$0xff]
        %v314 = vld [vmem:[%s233 + $0xf8] sm:$0xff]
        %v347 = vunpack.c.l.b16 %v283
        %v348 = vunpack.c.h.b16 %v283
        %v349 = vunpack.c.l.b16 %v284
        %v350 = vunpack.c.h.b16 %v284
        %v351 = vunpack.c.l.b16 %v285
        %v352 = vunpack.c.h.b16 %v285
        %v353 = vunpack.c.l.b16 %v286
        %v354 = vunpack.c.h.b16 %v286
        %v355 = vunpack.c.l.b16 %v287
        %v356 = vunpack.c.h.b16 %v287
        %v357 = vunpack.c.l.b16 %v288
        %v358 = vunpack.c.h.b16 %v288
        %v359 = vunpack.c.l.b16 %v289
        %v360 = vunpack.c.h.b16 %v289
        %v361 = vunpack.c.l.b16 %v290
        %v362 = vunpack.c.h.b16 %v290
        %v363 = vunpack.c.l.b16 %v291
        %v364 = vunpack.c.h.b16 %v291
        %v365 = vunpack.c.l.b16 %v292
        %v366 = vunpack.c.h.b16 %v292
        %v367 = vunpack.c.l.b16 %v293
        %v368 = vunpack.c.h.b16 %v293
        %v369 = vunpack.c.l.b16 %v294
        %v370 = vunpack.c.h.b16 %v294
        %v371 = vunpack.c.l.b16 %v295
        %v372 = vunpack.c.h.b16 %v295
        %v373 = vunpack.c.l.b16 %v296
        %v374 = vunpack.c.h.b16 %v296
        %v375 = vunpack.c.l.b16 %v297
        %v376 = vunpack.c.h.b16 %v297
        %v377 = vunpack.c.l.b16 %v298
        %v378 = vunpack.c.h.b16 %v298
        %v379 = vunpack.c.l.b16 %v299
        %v380 = vunpack.c.h.b16 %v299
        %v381 = vunpack.c.l.b16 %v300
        %v382 = vunpack.c.h.b16 %v300
        %v383 = vunpack.c.l.b16 %v301
        %v384 = vunpack.c.h.b16 %v301
        %v385 = vunpack.c.l.b16 %v302
        %v386 = vunpack.c.h.b16 %v302
        %v387 = vunpack.c.l.b16 %v303
        %v388 = vunpack.c.h.b16 %v303
        %v389 = vunpack.c.l.b16 %v304
        %v390 = vunpack.c.h.b16 %v304
        %v391 = vunpack.c.l.b16 %v305
        %v392 = vunpack.c.h.b16 %v305
        %v393 = vunpack.c.l.b16 %v306
        %v394 = vunpack.c.h.b16 %v306
        %v395 = vunpack.c.l.b16 %v307
        %v396 = vunpack.c.h.b16 %v307
        %v397 = vunpack.c.l.b16 %v308
        %v398 = vunpack.c.h.b16 %v308
        %v399 = vunpack.c.l.b16 %v309
        %v400 = vunpack.c.h.b16 %v309
        %v401 = vunpack.c.l.b16 %v310
        %v402 = vunpack.c.h.b16 %v310
        %v403 = vunpack.c.l.b16 %v311
        %v404 = vunpack.c.h.b16 %v311
        %v405 = vunpack.c.l.b16 %v312
        %v406 = vunpack.c.h.b16 %v312
        %v407 = vunpack.c.l.b16 %v313
        %v408 = vunpack.c.h.b16 %v313
        %v409 = vunpack.c.l.b16 %v314
        %v410 = vunpack.c.h.b16 %v314
        %v411 = vpack.c.b16 %v351, %v347
        %v412 = vpack.c.b16 %v352, %v348
        %v413 = vpack.c.b16 %v353, %v349
        %v414 = vpack.c.b16 %v354, %v350
        %v415 = vpack.c.b16 %v359, %v355
        %v416 = vpack.c.b16 %v360, %v356
        %v417 = vpack.c.b16 %v361, %v357
        %v418 = vpack.c.b16 %v362, %v358
        %v419 = vpack.c.b16 %v367, %v363
        %v420 = vpack.c.b16 %v368, %v364
        %v421 = vpack.c.b16 %v369, %v365
        %v422 = vpack.c.b16 %v370, %v366
        %v423 = vpack.c.b16 %v375, %v371
        %v424 = vpack.c.b16 %v376, %v372
        %v425 = vpack.c.b16 %v377, %v373
        %v426 = vpack.c.b16 %v378, %v374
        %v427 = vpack.c.b16 %v383, %v379
        %v428 = vpack.c.b16 %v384, %v380
        %v429 = vpack.c.b16 %v385, %v381
        %v430 = vpack.c.b16 %v386, %v382
        %v431 = vpack.c.b16 %v391, %v387
        %v432 = vpack.c.b16 %v392, %v388
        %v433 = vpack.c.b16 %v393, %v389
        %v434 = vpack.c.b16 %v394, %v390
        %v435 = vpack.c.b16 %v399, %v395
        %v436 = vpack.c.b16 %v400, %v396
        %v437 = vpack.c.b16 %v401, %v397
        %v438 = vpack.c.b16 %v402, %v398
        %v439 = vpack.c.b16 %v407, %v403
        %v440 = vpack.c.b16 %v408, %v404
        %v441 = vpack.c.b16 %v409, %v405
        %v442 = vpack.c.b16 %v410, %v406
        %475 = vmatprep.subr.bf16.mxu0 %v412
        %476 = vmatpush1.bf16.msra.mxu0 %v411
        %477 = vmatprep.subr.bf16.mxu0 %v416
        %478 = vmatpush1.bf16.msra.mxu0 %v415
        %479 = vmatprep.subr.bf16.mxu0 %v420
        %480 = vmatpush1.bf16.msra.mxu0 %v419
        %481 = vmatprep.subr.bf16.mxu0 %v424
        %482 = vmatpush1.bf16.msra.mxu0 %v423
        %483 = vmatprep.subr.bf16.mxu0 %v428
        %484 = vmatpush1.bf16.msra.mxu0 %v427
        %485 = vmatprep.subr.bf16.mxu0 %v432
        %486 = vmatpush1.bf16.msra.mxu0 %v431
        %487 = vmatprep.subr.bf16.mxu0 %v436
        %488 = vmatpush1.bf16.msra.mxu0 %v435
        %489 = vmatprep.subr.bf16.mxu0 %v440
        %490 = vmatpush1.bf16.msra.mxu0 %v439
        %491 = vmatprep.subr.bf16.mxu0 0
        %492 = vmatpush1.bf16.msra.mxu0 0
        %493 = vmatprep.subr.bf16.mxu0 0
        %494 = vmatpush1.bf16.msra.mxu0 0
        %495 = vmatprep.subr.bf16.mxu0 0
        %496 = vmatpush1.bf16.msra.mxu0 0
        %497 = vmatprep.subr.bf16.mxu0 0
        %498 = vmatpush1.bf16.msra.mxu0 0
        %499 = vmatprep.subr.bf16.mxu0 0
        %500 = vmatpush1.bf16.msra.mxu0 0
        %501 = vmatprep.subr.bf16.mxu0 0
        %502 = vmatpush1.bf16.msra.mxu0 0
        %503 = vmatprep.subr.bf16.mxu0 0
        %504 = vmatpush1.bf16.msra.mxu0 0
        %505 = vmatprep.subr.bf16.mxu0 0
        %506 = vmatpush1.bf16.msra.mxu0 0
        %507 = vmatprep.mubr.bf16.mxu0 0
        %508 = vmatmul.mubr.bf16.gmra.mrb[0].mxu0 %v282
        %v509 = vpop.f32.mrb[0].mxu0
        %v510 = vadd.f32 0.0, %v509
        %v511 = vpop.f32.mrb[0].mxu0
        %v512 = vadd.f32 0.0, %v511
        %v513 = vpop.f32.mrb[0].mxu0
        %v514 = vpop.f32.mrb[0].mxu0
        %515 = vdwg.mxu0
        %516 = vmatprep.subr.bf16.mxu0 %v414
        %517 = vmatpush1.bf16.msra.mxu0 %v413
        %518 = vmatprep.subr.bf16.mxu0 %v418
        %519 = vmatpush1.bf16.msra.mxu0 %v417
        %520 = vmatprep.subr.bf16.mxu0 %v422
        %521 = vmatpush1.bf16.msra.mxu0 %v421
        %522 = vmatprep.subr.bf16.mxu0 %v426
        %523 = vmatpush1.bf16.msra.mxu0 %v425
        %524 = vmatprep.subr.bf16.mxu0 %v430
        %525 = vmatpush1.bf16.msra.mxu0 %v429
        %526 = vmatprep.subr.bf16.mxu0 %v434
        %527 = vmatpush1.bf16.msra.mxu0 %v433
        %528 = vmatprep.subr.bf16.mxu0 %v438
        %529 = vmatpush1.bf16.msra.mxu0 %v437
        %530 = vmatprep.subr.bf16.mxu0 %v442
        %531 = vmatpush1.bf16.msra.mxu0 %v441
        %532 = vmatprep.subr.bf16.mxu0 0
        %533 = vmatpush1.bf16.msra.mxu0 0
        %534 = vmatprep.subr.bf16.mxu0 0
        %535 = vmatpush1.bf16.msra.mxu0 0
        %536 = vmatprep.subr.bf16.mxu0 0
        %537 = vmatpush1.bf16.msra.mxu0 0
        %538 = vmatprep.subr.bf16.mxu0 0
        %539 = vmatpush1.bf16.msra.mxu0 0
        %540 = vmatprep.subr.bf16.mxu0 0
        %541 = vmatpush1.bf16.msra.mxu0 0
        %542 = vmatprep.subr.bf16.mxu0 0
        %543 = vmatpush1.bf16.msra.mxu0 0
        %544 = vmatprep.subr.bf16.mxu0 0
        %545 = vmatpush1.bf16.msra.mxu0 0
        %546 = vmatprep.subr.bf16.mxu0 0
        %547 = vmatpush1.bf16.msra.mxu0 0
        %548 = vmatprep.mubr.bf16.mxu0 0
        %549 = vmatmul.mubr.bf16.gmra.mrb[0].mxu0 %v282
        %v550 = vpop.f32.mrb[0].mxu0
        %v551 = vadd.f32 0.0, %v550
        %v552 = vpop.f32.mrb[0].mxu0
        %v553 = vadd.f32 0.0, %v552
        %v554 = vpop.f32.mrb[0].mxu0
        %v555 = vpop.f32.mrb[0].mxu0
        %556 = vdwg.mxu0
        %v557 = vxor.u32 %v510, 2147483648
        %v558 = vxor.u32 %v512, 2147483648
        %v559 = vmul.f32 %v557, 1.442695
        %v560 = vpow.pop %v559
        %v561 = vmul.f32 %v558, 1.442695
        %v562 = vpow.pop %v561
        %v563 = vadd.f32 %v560, 1.0
        %v564 = vadd.f32 %v562, 1.0
        %v565 = vrcp.pop %v563
        %v566 = vmul.f32 1.0, %v565
        %v567 = vrcp.pop %v564
        %v568 = vmul.f32 1.0, %v567
        %v569 = vmul.f32 %v510, %v566
        %v570 = vmul.f32 %v512, %v568
        %v571 = vmul.f32 %v569, %v551
        %v572 = vmul.f32 %v570, %v553
        %v573 = vld [vmem:[%s274] sm:$0xff]
        %v574 = vpack.c.bf16 %v571, %v571
        %v575 = vpack.c.bf16 %v572, %v572
        %v576 = vld [vmem:[%s242] sm:$0xf]
        %v577 = vld [vmem:[%s242 + $0x4] sm:$0xf]
        %v578 = vld [vmem:[%s242 + $0x8] sm:$0xf]
        %v579 = vld [vmem:[%s242 + $0xc] sm:$0xf]
        %v580 = vld [vmem:[%s242 + $0x10] sm:$0xf]
        %v581 = vld [vmem:[%s242 + $0x14] sm:$0xf]
        %v582 = vld [vmem:[%s242 + $0x18] sm:$0xf]
        %v583 = vld [vmem:[%s242 + $0x1c] sm:$0xf]
        %v584 = vld [vmem:[%s242 + $0x20] sm:$0xf]
        %v585 = vld [vmem:[%s242 + $0x24] sm:$0xf]
        %v586 = vld [vmem:[%s242 + $0x28] sm:$0xf]
        %v587 = vld [vmem:[%s242 + $0x2c] sm:$0xf]
        %v588 = vld [vmem:[%s242 + $0x30] sm:$0xf]
        %v589 = vld [vmem:[%s242 + $0x34] sm:$0xf]
        %v590 = vld [vmem:[%s242 + $0x38] sm:$0xf]
        %v591 = vld [vmem:[%s242 + $0x3c] sm:$0xf]
        %v592 = vld [vmem:[%s242 + $0x40] sm:$0xf]
        %v593 = vld [vmem:[%s242 + $0x44] sm:$0xf]
        %v594 = vld [vmem:[%s242 + $0x48] sm:$0xf]
        %v595 = vld [vmem:[%s242 + $0x4c] sm:$0xf]
        %v596 = vld [vmem:[%s242 + $0x50] sm:$0xf]
        %v597 = vld [vmem:[%s242 + $0x54] sm:$0xf]
        %v598 = vld [vmem:[%s242 + $0x58] sm:$0xf]
        %v599 = vld [vmem:[%s242 + $0x5c] sm:$0xf]
        %v600 = vld [vmem:[%s242 + $0x60] sm:$0xf]
        %v601 = vld [vmem:[%s242 + $0x64] sm:$0xf]
        %v602 = vld [vmem:[%s242 + $0x68] sm:$0xf]
        %v603 = vld [vmem:[%s242 + $0x6c] sm:$0xf]
        %v604 = vld [vmem:[%s242 + $0x70] sm:$0xf]
        %v605 = vld [vmem:[%s242 + $0x74] sm:$0xf]
        %v606 = vld [vmem:[%s242 + $0x78] sm:$0xf]
        %v607 = vld [vmem:[%s242 + $0x7c] sm:$0xf]
        %v640 = vunpack.c.l.b16 %v576
        %v641 = vunpack.c.l.b16 %v577
        %v642 = vunpack.c.l.b16 %v578
        %v643 = vunpack.c.l.b16 %v579
        %v644 = vunpack.c.l.b16 %v580
        %v645 = vunpack.c.l.b16 %v581
        %v646 = vunpack.c.l.b16 %v582
        %v647 = vunpack.c.l.b16 %v583
        %v648 = vunpack.c.l.b16 %v584
        %v649 = vunpack.c.l.b16 %v585
        %v650 = vunpack.c.l.b16 %v586
        %v651 = vunpack.c.l.b16 %v587
        %v652 = vunpack.c.l.b16 %v588
        %v653 = vunpack.c.l.b16 %v589
        %v654 = vunpack.c.l.b16 %v590
        %v655 = vunpack.c.l.b16 %v591
        %v656 = vunpack.c.l.b16 %v592
        %v657 = vunpack.c.l.b16 %v593
        %v658 = vunpack.c.l.b16 %v594
        %v659 = vunpack.c.l.b16 %v595
        %v660 = vunpack.c.l.b16 %v596
        %v661 = vunpack.c.l.b16 %v597
        %v662 = vunpack.c.l.b16 %v598
        %v663 = vunpack.c.l.b16 %v599
        %v664 = vunpack.c.l.b16 %v600
        %v665 = vunpack.c.l.b16 %v601
        %v666 = vunpack.c.l.b16 %v602
        %v667 = vunpack.c.l.b16 %v603
        %v668 = vunpack.c.l.b16 %v604
        %v669 = vunpack.c.l.b16 %v605
        %v670 = vunpack.c.l.b16 %v606
        %v671 = vunpack.c.l.b16 %v607
        %v672 = vpack.c.b16 %v641, %v640
        %v673 = vpack.c.b16 %v643, %v642
        %v674 = vpack.c.b16 %v645, %v644
        %v675 = vpack.c.b16 %v647, %v646
        %v676 = vpack.c.b16 %v649, %v648
        %v677 = vpack.c.b16 %v651, %v650
        %v678 = vpack.c.b16 %v653, %v652
        %v679 = vpack.c.b16 %v655, %v654
        %v680 = vpack.c.b16 %v657, %v656
        %v681 = vpack.c.b16 %v659, %v658
        %v682 = vpack.c.b16 %v661, %v660
        %v683 = vpack.c.b16 %v663, %v662
        %v684 = vpack.c.b16 %v665, %v664
        %v685 = vpack.c.b16 %v667, %v666
        %v686 = vpack.c.b16 %v669, %v668
        %v687 = vpack.c.b16 %v671, %v670
        %704 = vmatprep.subr.bf16.mxu0 0
        %705 = vmatpush1.bf16.msra.mxu0 %v672
        %706 = vmatprep.subr.bf16.mxu0 0
        %707 = vmatpush1.bf16.msra.mxu0 %v673
        %708 = vmatprep.subr.bf16.mxu0 0
        %709 = vmatpush1.bf16.msra.mxu0 %v674
        %710 = vmatprep.subr.bf16.mxu0 0
        %711 = vmatpush1.bf16.msra.mxu0 %v675
        %712 = vmatprep.subr.bf16.mxu0 0
        %713 = vmatpush1.bf16.msra.mxu0 %v676
        %714 = vmatprep.subr.bf16.mxu0 0
        %715 = vmatpush1.bf16.msra.mxu0 %v677
        %716 = vmatprep.subr.bf16.mxu0 0
        %717 = vmatpush1.bf16.msra.mxu0 %v678
        %718 = vmatprep.subr.bf16.mxu0 0
        %719 = vmatpush1.bf16.msra.mxu0 %v679
        %720 = vmatprep.subr.bf16.mxu0 0
        %721 = vmatpush1.bf16.msra.mxu0 %v680
        %722 = vmatprep.subr.bf16.mxu0 0
        %723 = vmatpush1.bf16.msra.mxu0 %v681
        %724 = vmatprep.subr.bf16.mxu0 0
        %725 = vmatpush1.bf16.msra.mxu0 %v682
        %726 = vmatprep.subr.bf16.mxu0 0
        %727 = vmatpush1.bf16.msra.mxu0 %v683
        %728 = vmatprep.subr.bf16.mxu0 0
        %729 = vmatpush1.bf16.msra.mxu0 %v684
        %730 = vmatprep.subr.bf16.mxu0 0
        %731 = vmatpush1.bf16.msra.mxu0 %v685
        %732 = vmatprep.subr.bf16.mxu0 0
        %733 = vmatpush1.bf16.msra.mxu0 %v686
        %734 = vmatprep.subr.bf16.mxu0 0
        %735 = vmatpush1.bf16.msra.mxu0 %v687
        %736 = vmatprep.mubr.bf16.mxu0 %v575
        %737 = vmatmul.mubr.bf16.gmra.mrb[0].mxu0 %v574
        %v738 = vpop.f32.mrb[0].mxu0
        %v739 = vadd.f32 0.0, %v738
        %v740 = vpop.f32.mrb[0].mxu0
        %v741 = vpop.f32.mrb[0].mxu0
        %v742 = vpop.f32.mrb[0].mxu0
        %743 = vdwg.mxu0
        %v744 = vadd.f32 %v573, %v739
        %745 = vst [vmem:[%s274] sm:$0xff] %v744
        %s746 = sand.u32 %s121, 1
        %s747 = scalar_lea.sflag [#allocation4], %s746
        %s748 = sand.u32 %s121, 1
        %s749 = smul.addr %s748, 8
        %s750 = scalar_lea.vmem [#allocation8], %s749
        // Predicated region
        $region49: #{tpu_custom_call.1} parent=31 // pred_check
          %p751 = pneg %p131
        $region50: #{tpu_custom_call.1} parent=31 // pred_check_branch
          %753 = sbr.rel (%p751) target = $region52
        $region51: #{tpu_custom_call.1} parent=31 // pred_region
          %s755 = ssub.s32 128, 128
          %756 = vsyncadd %s747, %s755
          %s757 = smul.addr %s27, 128
          %s758 = scalar_lea.hbm %s3, %s757
          %s760 = sshll.u32 %s750, 4
          %s761 = int_to_ptr.vmem [resolvable:$true] %s760
          %763 = dma.vmem_to_hbm [thread:$0]  %s761, 128, %s758, %s747
        $region52: #{tpu_custom_call.1} parent=31 // pred_fallthru
          _
      $region32: #{tpu_custom_call.1} parent=5 // pred_fallthru
        _
      %p764 = scmp.le.s32.totalorder 2, %s18
      // Predicated region
      $region53: #{tpu_custom_call.1} parent=5 // pred_check
        %p765 = pneg %p764
      $region54: #{tpu_custom_call.1} parent=5 // pred_check_branch
        %767 = sbr.rel (%p765) target = $region56
      $region55: #{tpu_custom_call.1} parent=5 // pred_region
        %s768 = ssub.s32 %s18, 2
        // Predicated region
        $region57: #{tpu_custom_call.1} parent=55 // pred_check
          %p769 = pneg %p137
        $region58: #{tpu_custom_call.1} parent=55 // pred_check_branch
          %771 = sbr.rel (%p769) target = $region60
        $region59: #{tpu_custom_call.1} parent=55 // pred_region
          %s772 = sand.u32 %s122, 1
          %s773 = scalar_lea.sflag [#allocation4], %s772
          %s774 = sand.u32 %s122, 1
          %s775 = smul.addr %s774, 8
          %s776 = scalar_lea.vmem [#allocation8], %s775
          %777 = dma.done %s773, 128
        $region60: #{tpu_custom_call.1} parent=55 // pred_fallthru
          _
      $region56: #{tpu_custom_call.1} parent=5 // pred_fallthru
        _
    $region6: #{tpu_custom_call.1} parent=1 // loop_footer
      %s22 = sadd.s32 1, %s18
    $region7: #{tpu_custom_call.1} parent=1 // loop_footer_branch
      %17 = sbr.rel target = $region3
    $region8: #{tpu_custom_call.1} parent=1 // loop_exit
      _
    %778 = vsyncpa [#allocation3], 1
    %s779 = scalar_lea.sflag [#allocation3], 1
    %780 = vsyncpa %s779, 1
    %781 = vsyncpa [#allocation6], 1
    %s782 = scalar_lea.sflag [#allocation6], 1
    %783 = vsyncpa %s782, 1
    %784 = vsyncpa [#allocation4], 1
    %s785 = scalar_lea.sflag [#allocation4], 1
    %786 = vsyncpa %s785, 1

</llo_original>
